<compile_context>
chip_gen: v7x
topology: tpu7x:2x2x1
jax: 0.10.0
libtpu: 0.0.40
codegen_flags: <defaults>
</compile_context>

<pallas_src>
import functools

import jax
import jax.numpy as jnp
import numpy as np
from jax.experimental import pallas as pl
from jax.experimental.pallas import tpu as pltpu


# ------------------------- per-generation configuration ---------------------

def _tpu_config():
    """Tiling / precision knobs chosen per TPU generation."""
    try:
        kind = jax.devices()[0].device_kind.lower()
    except Exception:
        kind = ""
    if "v2" in kind or "v3" in kind:
        # tiny-VMEM legacy chips: stay very conservative, f32 elementwise.
        return dict(vmem_limit=12 * 1024 * 1024, q_tile=256, k_tile=256,
                    head_tile=4, bf16_exp=False)
    if "v4" in kind or "v5" in kind:
        # v5e/v5p/v4: 128 MiB VMEM, no bf16 EUP/VPU path -> f32 exp/sigmoid.
        return dict(vmem_limit=96 * 1024 * 1024, q_tile=512, k_tile=512,
                    head_tile=8, bf16_exp=False)
    if "v6" in kind:
        # v6e: 128 MiB VMEM, bf16 EUP path.
        return dict(vmem_limit=96 * 1024 * 1024, q_tile=512, k_tile=512,
                    head_tile=8, bf16_exp=True)
    # v7x (or unknown): only 64 MiB VMEM per TC -> conservative scoped budget,
    # smaller head tile; HBM is fast so EUP (exp) is the binding unit -> bf16 exp.
    return dict(vmem_limit=40 * 1024 * 1024, q_tile=512, k_tile=512,
                head_tile=4, bf16_exp=True)


# ------------------------------ tile pickers --------------------------------

def _round_up(x, m):
    return ((x + m - 1) // m) * m


def _pick_time_tile(T, target):
    """Largest multiple of 128 <= target that divides T, else T (untiled)."""
    if T <= target:
        return T
    cand = (target // 128) * 128
    while cand >= 128:
        if T % cand == 0:
            return cand
        cand -= 128
    return T


def _pick_head_tile(BH, target):
    """Largest divisor of BH that is <= target (heads processed per grid step)."""
    for hb in range(max(1, min(BH, target)), 0, -1):
        if BH % hb == 0:
            return hb
    return 1


def _head_tile_vmem_cap(Dh, P, Tq, Tk, budget_bytes):
    """Rough per-head-block VMEM footprint -> max head tile that fits budget."""
    per_h = (Tk * Tq * (4 + 4)                          # f32 scores + probs temporaries
             + Dh * Tq * 4                              # f32 accumulator scratch
             + 2 * 2 * (Dh * (Tq + 2 * Tk) + P * Tq)    # double-buffered bf16 q/k/v/pen
             + 2 * 2 * Dh * Tq                          # double-buffered bf16 output
             + 3 * 8 * Tq * 4)                          # m/l/pen rows (8-sublane padded)
    return max(1, budget_bytes // max(per_h, 1))


def _conv_time_tile(T, cin, cout, in_bytes, out_bytes, vmem_budget):
    """Largest lane-dense time tile such that double-buffered in+out tiles fit."""
    per_t = 2 * (cin * in_bytes + cout * out_bytes)
    target = max(128, min(4096, (vmem_budget // max(per_t, 1)) // 128 * 128))
    return _pick_time_tile(T, target)


# ----------------------------- Pallas kernels ------------------------------

def _conv1x1_kernel(x_ref, w_ref, b_ref, o_ref):
    # x_ref: (1, Cin, Tt)  w_ref: (Cout, Cin) bf16  b_ref: (Cout, 1) f32
    # o_ref: (1, Cout, Tt)
    x = x_ref[0].astype(jnp.bfloat16)
    y = jnp.dot(w_ref[...], x, preferred_element_type=jnp.float32)  # MXU, f32 acc
    y = y + b_ref[...]
    o_ref[0] = y.astype(o_ref.dtype)


def conv1x1(x, w, b, *, out_dtype, vmem_limit):
    """Pointwise Conv1d: x (B, Cin, T), w (Cout, Cin), b (Cout,) -> (B, Cout, T)."""
    B, Cin, T = x.shape
    Cout = w.shape[0]
    in_bytes = np.dtype(x.dtype).itemsize
    out_bytes = np.dtype(out_dtype).itemsize
    Tt = _conv_time_tile(T, Cin, Cout, in_bytes, out_bytes, vmem_limit // 2)
    w_bf = w.astype(jnp.bfloat16)                 # cast once in the wrapper
    b2 = b.reshape(Cout, 1).astype(jnp.float32)
    return pl.pallas_call(
        _conv1x1_kernel,
        out_shape=jax.ShapeDtypeStruct((B, Cout, T), out_dtype),
        grid_spec=pltpu.PrefetchScalarGridSpec(
            num_scalar_prefetch=0,
            grid=(B, T // Tt),
            in_specs=[
                pl.BlockSpec((1, Cin, Tt), lambda bi, ti: (bi, 0, ti)),
                pl.BlockSpec((Cout, Cin), lambda bi, ti: (0, 0)),
                pl.BlockSpec((Cout, 1), lambda bi, ti: (0, 0)),
            ],
            out_specs=pl.BlockSpec((1, Cout, Tt), lambda bi, ti: (bi, 0, ti)),
        ),
        compiler_params=pltpu.CompilerParams(
            dimension_semantics=("parallel", "parallel"),
            vmem_limit_bytes=vmem_limit,
        ),
    )(x, w_bf, b2)


def _local_attn_kernel(fac_ref, q_ref, k_ref, v_ref, pb_ref, o_ref,
                       m_sc, l_sc, acc_sc, pen_sc,
                       *, t_valid, t_padded, use_bf16_exp):
    # fac_ref: (P,) f32 in SMEM
    # q_ref  : (Hb, Dh, Tq) bf16   k_ref/v_ref: (Hb, Dh, Tk) bf16
    # pb_ref : (Hb, P,  Tq) bf16   o_ref      : (Hb, Dh, Tq) bf16
    # scratch: m/l/pen (Hb, 1, Tq) f32, acc (Hb, Dh, Tq) f32
    ki = pl.program_id(2)
    nk = pl.num_programs(2)

    @pl.when(ki == 0)
    def _():
        m_sc[...] = jnp.full(m_sc.shape, -jnp.inf, dtype=m_sc.dtype)
        l_sc[...] = jnp.zeros(l_sc.shape, l_sc.dtype)
        acc_sc[...] = jnp.zeros(acc_sc.shape, acc_sc.dtype)
        # penalty row depends only on the query tile: compute once, keep resident.
        # sigmoid stays f32 (safe on every generation, and this runs once/q-tile).
        pb = jax.nn.sigmoid(pb_ref[...].astype(jnp.float32))        # (Hb, P, Tq)
        P = pb.shape[1]
        pen = fac_ref[0] * pb[:, 0:1, :]
        for pi in range(1, P):
            pen = pen + fac_ref[pi] * pb[:, pi:pi + 1, :]
        pen_sc[...] = pen                                            # (Hb, 1, Tq)

    q = q_ref[...]                                  # (Hb, Dh, Tq) bf16 (stored)
    k = k_ref[...]                                  # (Hb, Dh, Tk) bf16 (stored)
    Tq = q.shape[2]
    Tk = k.shape[2]

    # Scores laid out (Hb, Tk, Tq): query positions stay on lanes, so penalty,
    # m, l, alpha and acc all broadcast along sublanes with no relayout.
    s = jnp.einsum('hdk,hdq->hkq', k, q,
                   preferred_element_type=jnp.float32)               # (Hb, Tk, Tq)

    # |i - j| penalty: one scalar tile offset + a single int->f32 convert.
    off = pl.program_id(1) * Tq - ki * Tk
    qpos = jax.lax.broadcasted_iota(jnp.int32, (Tk, Tq), 1)
    kpos = jax.lax.broadcasted_iota(jnp.int32, (Tk, Tq), 0)
    diff = jnp.abs(qpos - kpos + off).astype(jnp.float32)
    s = s - pen_sc[...] * diff[None]

    # key-side mask for padded time positions (static check -> no cost when T%128==0)
    if t_valid < t_padded:
        j_idx = jax.lax.broadcasted_iota(jnp.int32, (Tk, 1), 0) + ki * Tk
        s = jnp.where((j_idx < t_valid)[None], s, -1e30)

    # online softmax over the key axis (axis=1); state kept in f32.
    m_prev = m_sc[...]
    m_new = jnp.maximum(m_prev, jnp.max(s, axis=1, keepdims=True))   # (Hb, 1, Tq)
    alpha = jnp.exp(m_prev - m_new)
    if use_bf16_exp:
        # v6e/v7x: bf16 EUP path ~halves the dominant exp cost.
        p = jnp.exp((s - m_new).astype(jnp.bfloat16))                # (Hb, Tk, Tq) bf16
        l_step = jnp.sum(p.astype(jnp.float32), axis=1, keepdims=True)
        p_mx = p
    else:
        # v5e and older: no bf16 EUP/VPU path -> keep exp in f32.
        p = jnp.exp(s - m_new)
        l_step = jnp.sum(p, axis=1, keepdims=True)
        p_mx = p.astype(jnp.bfloat16)
    l_sc[...] = alpha * l_sc[...] + l_step
    pv = jnp.einsum('hdk,hkq->hdq', v_ref[...], p_mx,
                    preferred_element_type=jnp.float32)              # (Hb, Dh, Tq)
    acc_sc[...] = alpha * acc_sc[...] + pv
    m_sc[...] = m_new

    @pl.when(ki == nk - 1)
    def _():
        inv_l = pl.reciprocal(l_sc[...], approx=True)                # EUP slot
        o_ref[...] = (acc_sc[...] * inv_l).astype(o_ref.dtype)


def local_attention_core(q, k, v, pen_base, factors, t_valid, *,
                         q_tile, k_tile, head_tile, vmem_limit, use_bf16_exp):
    """q,k,v: (BH, Dh, Tp) bf16; pen_base: (BH, P, Tp) bf16; factors: (P,) f32
    -> (BH, Dh, Tp) bf16. t_valid = un-padded T (keys >= t_valid are masked)."""
    BH, Dh, Tp = q.shape
    P = pen_base.shape[1]
    Tq = _pick_time_tile(Tp, q_tile)
    Tk = _pick_time_tile(Tp, k_tile)
    hb_cap = _head_tile_vmem_cap(Dh, P, Tq, Tk, int(vmem_limit * 0.6))
    Hb = _pick_head_tile(BH, min(head_tile, hb_cap))
    fac = factors.reshape(P).astype(jnp.float32)
    grid = (BH // Hb, Tp // Tq, Tp // Tk)
    kernel = functools.partial(_local_attn_kernel, t_valid=t_valid, t_padded=Tp,
                               use_bf16_exp=use_bf16_exp)
    return pl.pallas_call(
        kernel,
        out_shape=jax.ShapeDtypeStruct((BH, Dh, Tp), jnp.bfloat16),
        grid_spec=pltpu.PrefetchScalarGridSpec(
            num_scalar_prefetch=0,
            grid=grid,
            in_specs=[
                pl.BlockSpec(memory_space=pltpu.MemorySpace.SMEM),   # penalize factors
                pl.BlockSpec((Hb, Dh, Tq), lambda b, qi, ki: (b, 0, qi)),
                pl.BlockSpec((Hb, Dh, Tk), lambda b, qi, ki: (b, 0, ki)),
                pl.BlockSpec((Hb, Dh, Tk), lambda b, qi, ki: (b, 0, ki)),
                pl.BlockSpec((Hb, P, Tq), lambda b, qi, ki: (b, 0, qi)),
            ],
            out_specs=pl.BlockSpec((Hb, Dh, Tq), lambda b, qi, ki: (b, 0, qi)),
            scratch_shapes=[
                pltpu.VMEM((Hb, 1, Tq), jnp.float32),    # running max m
                pltpu.VMEM((Hb, 1, Tq), jnp.float32),    # running sum l
                pltpu.VMEM((Hb, Dh, Tq), jnp.float32),   # output accumulator
                pltpu.VMEM((Hb, 1, Tq), jnp.float32),    # penalty row (per q tile)
            ],
        ),
        compiler_params=pltpu.CompilerParams(
            dimension_semantics=("parallel", "parallel", "arbitrary"),
            vmem_limit_bytes=vmem_limit,
        ),
    )(fac, q, k, v, pen_base)


# ------------------------------ module wrapper ------------------------------

def init_local_attention_params(key, embd_dim, freq_dim, num_heads, num_penalize):
    C = embd_dim * freq_dim
    ks = jax.random.split(key, 10)

    def w(k, shape, scale=0.1):
        return scale * jax.random.normal(k, shape, dtype=jnp.float32)

    params = {
        "wq": w(ks[0], (embd_dim, C)), "bq": w(ks[1], (embd_dim,), 0.01),
        "wk": w(ks[2], (embd_dim, C)), "bk": w(ks[3], (embd_dim,), 0.01),
        "wv": w(ks[4], (embd_dim, C)), "bv": w(ks[5], (embd_dim,), 0.01),
        # penalize_conv weight is scaled by 0.001 in the reference __init__
        "wp": w(ks[6], (num_heads * num_penalize, C)) * 0.001,
        "bp": w(ks[7], (num_heads * num_penalize,), 0.01),
        "wo": w(ks[8], (C, embd_dim)), "bo": w(ks[9], (C,), 0.01),
        "penalize_factors": jnp.arange(1, num_penalize + 1, dtype=jnp.float32),
    }
    return params


def local_attention_forward(x, params, embd_dim, freq_dim, num_heads, num_penalize):
    is_spectral = (x.ndim == 4)
    if is_spectral:
        B, E, F, T = x.shape
        assert E == embd_dim and F == freq_dim
        xf = x.reshape(B, E * F, T)
    else:
        assert freq_dim == 1
        xf = x
        B, _, T = xf.shape

    E = embd_dim
    H = num_heads
    Dh = E // H
    P = num_penalize
    assert E % H == 0

    cfg = _tpu_config()

    # Pad time up to a multiple of 128: lane-dense tiles + bounded VMEM for any T.
    # Padded key positions are masked inside the attention kernel; padded query
    # positions produce garbage that is sliced off below.
    Tp = _round_up(T, 128)
    if Tp != T:
        xf = jnp.pad(xf, ((0, 0), (0, 0), (0, Tp - T)))

    # fused q/k/v/penalty projection: one pass over x, bf16 output (halves the
    # HBM stream that attention re-reads T/Tq times).
    w_fused = jnp.concatenate([params["wq"], params["wk"], params["wv"], params["wp"]], axis=0)
    b_fused = jnp.concatenate([params["bq"], params["bk"], params["bv"], params["bp"]], axis=0)
    qkvp = conv1x1(xf, w_fused, b_fused, out_dtype=jnp.bfloat16,
                   vmem_limit=cfg["vmem_limit"])                    # (B, 3E + H*P, Tp)

    # channel splits / reshapes only — no transposes anywhere
    q = qkvp[:, 0 * E:1 * E, :].reshape(B * H, Dh, Tp)
    k = qkvp[:, 1 * E:2 * E, :].reshape(B * H, Dh, Tp)
    v = qkvp[:, 2 * E:3 * E, :].reshape(B * H, Dh, Tp)
    pen_base = qkvp[:, 3 * E:, :].reshape(B * H, P, Tp)

    attn = local_attention_core(
        q, k, v, pen_base, params["penalize_factors"], T,
        q_tile=cfg["q_tile"], k_tile=cfg["k_tile"], head_tile=cfg["head_tile"],
        vmem_limit=cfg["vmem_limit"], use_bf16_exp=cfg["bf16_exp"])  # (BH, Dh, Tp) bf16

    proj = conv1x1(attn.reshape(B, E, Tp), params["wo"], params["bo"],
                   out_dtype=x.dtype, vmem_limit=cfg["vmem_limit"])  # (B, E*F, Tp)

    if Tp != T:
        proj = proj[..., :T]
    if is_spectral:
        proj = proj.reshape(B, embd_dim, freq_dim, T)
    return proj


# --------------------------- pure-JAX reference -----------------------------

def local_attention_reference(x, params, embd_dim, freq_dim, num_heads, num_penalize):
    is_spectral = (x.ndim == 4)
    xf = x.reshape(x.shape[0], embd_dim * freq_dim, x.shape[-1]) if is_spectral else x
    B, C, T = xf.shape
    H, P = num_heads, num_penalize
    Dh = embd_dim // H

    def c1(w, b):
        return jnp.einsum("oc,bct->bot", w, xf) + b[None, :, None]

    pos = jnp.arange(T)
    diff = jnp.abs(pos[None, :] - pos[:, None]).astype(jnp.float32)

    pb = jax.nn.sigmoid(c1(params["wp"], params["bp"]).reshape(B * H, P, T))
    pen = jnp.sum(params["penalize_factors"][None, :, None] * pb, axis=1)  # (BH, T)
    pen_term = pen[:, :, None] * diff[None]

    q = c1(params["wq"], params["bq"]).reshape(B * H, Dh, T).transpose(0, 2, 1)
    k = c1(params["wk"], params["bk"]).reshape(B * H, Dh, T).transpose(0, 2, 1)
    v = c1(params["wv"], params["bv"]).reshape(B * H, Dh, T).transpose(0, 2, 1)

    w = jax.nn.softmax(jnp.einsum("bid,bjd->bij", q, k) - pen_term, axis=-1)
    attn = jnp.einsum("bij,bjd->bid", w, v)

    a = attn.transpose(0, 2, 1).reshape(B, embd_dim, T)
    proj = jnp.einsum("oc,bct->bot", params["wo"], a) + params["bo"][None, :, None]
    if is_spectral:
        proj = proj.reshape(B, embd_dim, freq_dim, T)
    return proj


# ---------------------------------- main ------------------------------------

if __name__ == "__main__":
    embd_dim, freq_dim, num_heads, num_penalize = 8, 4, 2, 3
    B, T = 2, 16

    key = jax.random.PRNGKey(0)
    k_param, k_x = jax.random.split(key)
    params = init_local_attention_params(k_param, embd_dim, freq_dim, num_heads, num_penalize)

    # spectral input (B, embd_dim, freq_dim, T)
    x = jax.random.normal(k_x, (B, embd_dim, freq_dim, T), dtype=jnp.float32)

    out = local_attention_forward(x, params, embd_dim, freq_dim, num_heads, num_penalize)
    out = jax.block_until_ready(out)

    ref = local_attention_reference(x, params, embd_dim, freq_dim, num_heads, num_penalize)
    assert out.shape == (B, embd_dim, freq_dim, T)
    # bf16 storage for q/k/v/pen/attn, bf16 MXU operands, (optionally) bf16 exp,
    # and approx reciprocal => looser tolerance than pure f32.
    err = float(jnp.max(jnp.abs(out - ref)))
    assert jnp.allclose(out, ref, atol=5e-2, rtol=5e-2), f"mismatch vs reference, max|err|={err}"

    print("KERNEL_OK")
</pallas_src>

<mosaic_0001>
module attributes {stable_mosaic.version = 11 : i64} {
  func.func @_conv1x1_kernel(%arg0: i32, %arg1: i32, %arg2: memref<1x32x128xf32, #tpu.memory_space<vmem>>, %arg3: memref<30x32xbf16, #tpu.memory_space<vmem>>, %arg4: memref<30x1xf32, #tpu.memory_space<vmem>>, %arg5: memref<1x30x128xbf16, #tpu.memory_space<vmem>>) attributes {dimension_semantics = [#tpu.dimension_semantics<parallel>, #tpu.dimension_semantics<parallel>], iteration_bounds = array<i64: 2, 1>, scalar_prefetch = 0 : i64, scratch_operands = 0 : i64, tpu.core_type = #tpu.core_type<tc>, window_params = [{transform_indices = @transform_0, window_bounds = array<i64: 1, 32, 128>}, {pipeline_mode = #tpu.pipeline_mode<synchronous>, transform_indices = @transform_1, window_bounds = array<i64: 30, 32>}, {pipeline_mode = #tpu.pipeline_mode<synchronous>, transform_indices = @transform_2, window_bounds = array<i64: 30, 1>}, {transform_indices = @transform_3, window_bounds = array<i64: 1, 30, 128>}]} {
    %c0 = arith.constant 0 : index
    %c0_0 = arith.constant 0 : index
    %c0_1 = arith.constant 0 : index
    %0 = vector.load %arg2[%c0, %c0_0, %c0_1] : memref<1x32x128xf32, #tpu.memory_space<vmem>>, vector<1x32x128xf32>
    %1 = vector.shape_cast %0 : vector<1x32x128xf32> to vector<32x128xf32>
    %2 = arith.truncf %1 : vector<32x128xf32> to vector<32x128xbf16>
    %c0_2 = arith.constant 0 : index
    %c0_3 = arith.constant 0 : index
    %3 = vector.load %arg3[%c0_2, %c0_3] : memref<30x32xbf16, #tpu.memory_space<vmem>>, vector<30x32xbf16>
    %cst = arith.constant dense<0.000000e+00> : vector<30x128xf32>
    %4 = tpu.matmul %3, %2, %cst {dimension_numbers = #tpu.dot_dimension_numbers<[1], [0], [0], [1], [0, 0, 1, 1], [], []>} : vector<30x32xbf16>, vector<32x128xbf16>, vector<30x128xf32> -> vector<30x128xf32>
    %c0_4 = arith.constant 0 : index
    %c0_5 = arith.constant 0 : index
    %5 = vector.load %arg4[%c0_4, %c0_5] : memref<30x1xf32, #tpu.memory_space<vmem>>, vector<30x1xf32>
    %6 = vector.broadcast %5 : vector<30x1xf32> to vector<30x128xf32>
    %7 = arith.addf %4, %6 : vector<30x128xf32>
    %8 = arith.truncf %7 : vector<30x128xf32> to vector<30x128xbf16>
    %c0_6 = arith.constant 0 : index
    %c0_7 = arith.constant 0 : index
    %c0_8 = arith.constant 0 : index
    %9 = vector.load %arg5[%c0_6, %c0_7, %c0_8] : memref<1x30x128xbf16, #tpu.memory_space<vmem>>, vector<1x30x128xbf16>
    %10 = vector.shape_cast %9 : vector<1x30x128xbf16> to vector<30x128xbf16>
    %11 = vector.shape_cast %8 : vector<30x128xbf16> to vector<1x30x128xbf16>
    tpu.vector_store %arg5[%c0_6, %c0_7, %c0_8], %11 {strides = array<i32>} : memref<1x30x128xbf16, #tpu.memory_space<vmem>>, vector<1x30x128xbf16>,
    return
  }
  func.func @transform_0(%arg0: i32, %arg1: i32) -> (i32, i32, i32) {
    %c0_i32 = arith.constant 0 : i32
    %c0_i32_0 = arith.constant 0 : i32
    return %arg0, %c0_i32, %arg1 : i32, i32, i32
  }
  func.func @transform_1(%arg0: i32, %arg1: i32) -> (i32, i32) {
    %c0_i32 = arith.constant 0 : i32
    %c0_i32_0 = arith.constant 0 : i32
    %c0_i32_1 = arith.constant 0 : i32
    return %c0_i32, %c0_i32_0 : i32, i32
  }
  func.func @transform_2(%arg0: i32, %arg1: i32) -> (i32, i32) {
    %c0_i32 = arith.constant 0 : i32
    %c0_i32_0 = arith.constant 0 : i32
    %c0_i32_1 = arith.constant 0 : i32
    return %c0_i32, %c0_i32_0 : i32, i32
  }
  func.func @transform_3(%arg0: i32, %arg1: i32) -> (i32, i32, i32) {
    %c0_i32 = arith.constant 0 : i32
    %c0_i32_0 = arith.constant 0 : i32
    return %arg0, %c0_i32, %arg1 : i32, i32, i32
  }
}

</mosaic_0001>

<llo_original>
// kernel: tpu_custom_call.1
$region0: #{tpu_custom_call.1}
  #allocation0 [shape = 'u32[]', space=smem, size = 0x4, offset = 0x4, fixed_abs, tag = 'smem constant byte address 0x4 - core index']
  #allocation1 [shape = 'u32[144,128]{1,0:T(1,128)}', space=vmem, size = 0x12000, scoped, tag = 'internal scratch']
  %s0 = inlined_call_operand.hbm [shape: f32[2,32,128], index: 0, kind: input, shape index: {}]
  %s1 = inlined_call_operand.vmem [shape: bf16[30,32], index: 1, kind: input, shape index: {}]
  %s2 = inlined_call_operand.vmem [shape: f32[30,1], index: 2, kind: input, shape index: {}]
  %s3 = inlined_call_operand.vmem [shape: bf16[2,30,128], index: 3, kind: output, shape index: {}]
  %s4 = sld [smem:[#allocation0]]
  $region49: #{tpu_custom_call.1} parent=0
    _
  %s6 = ssub.s32 1, %s4
  %s7 = scalar_select 0, %s6, %s4
  $region1: #{tpu_custom_call.1} parent=0
    #allocation2 [shape = 'u8[32768]{0}', space=vmem, size = 0x8000, scoped, tag = 'input window, operand 0']
    #allocation3 [shape = 's32[2]{0}', space=sflag, size = 0x8, scoped, tag = 'scoped memory for tpu_custom_call.1']
    %8 = vsyncpa [#allocation3], 0
    %s9 = scalar_lea.sflag [#allocation3], 1
    %10 = vsyncpa %s9, 0
    loop: start=0, step=1, limit=4
    $region2: #{tpu_custom_call.1} parent=1 // loop_pre_header
      _
    $region3: #{tpu_custom_call.1} parent=1 // loop_header
      %s12 = sphi 0, %s16
      %p13 = scmp.ge.s32.totalorder %s12, 4
      %s19 = sphi 0, %s31
      %s20 = sphi 0, %s27
      %s21 = sphi 0, %s19
      %s22 = sphi 0, %s20
      %s23 = sphi 0, %s21
      %s24 = sphi 0, %s22
      %s36 = sphi 0, %s38
      %s39 = sphi 0, %s36
      %s40 = sphi 0, %s39
      %s56 = sphi 0, %s40
      %s60 = sphi 0, %s60
      %s62 = sphi 0, %s60
      %s63 = sphi 0, %s62
      %s77 = sphi 0, %s63
      %s81 = sphi 0, %s81
      %s83 = sphi 0, %s81
      %s84 = sphi 0, %s83
      %s98 = sphi 0, %s84
      %s106 = sphi 0, %s108
      %s109 = sphi 0, %s106
      %s110 = sphi 0, %s109
      %s126 = sphi 0, %s110
    $region4: #{tpu_custom_call.1} parent=1 // loop_header_branch
      %15 = sbr.rel (%p13) target = $region8
    $region5: #{tpu_custom_call.1} parent=1 // loop_body
      %s17 = ssub.s32 %s12, 1
      %s18 = ssub.s32 %s12, 2
      %s25 = sadd.s32 1, %s20
      %p26 = scmp.ge.s32.totalorder %s25, 1
      %s27 = scalar_select %p26, 0, %s25
      %s28 = sadd.s32 1, %s19
      %s29 = scalar_select %p26, %s28, %s19
      %p30 = scmp.ge.s32.totalorder %s29, 2
      %s31 = scalar_select %p30, 0, %s29
      %s32 = ssub.s32 %s19, %s31
      %s33 = ssub.s32 %s20, %s27
      %s34 = sor.u32 %s32, %s33
      %p35 = scmp.eq.s32.totalorder %s34, 0
      %s37 = sadd.s32 %s36, 1
      %s38 = scalar_select %p35, %s36, %s37
      %p41 = pneg %p35
      %p42 = scmp.eq.s32.totalorder %s12, 1
      %p43 = por %p41, %p42
      %p44 = scmp.ne.s32.totalorder %s36, %s39
      %p45 = scmp.eq.s32.totalorder %s12, 0
      %p46 = por %p44, %p45
      %p47 = scmp.ne.s32.totalorder %s36, %s39
      %p48 = scmp.eq.s32.totalorder %s17, 1
      %p49 = por %p47, %p48
      %p50 = scmp.ne.s32.totalorder %s39, %s40
      %p51 = scmp.eq.s32.totalorder %s17, 0
      %p52 = por %p50, %p51
      %p53 = scmp.ne.s32.totalorder %s39, %s40
      %p54 = scmp.eq.s32.totalorder %s18, 1
      %p55 = por %p53, %p54
      %p57 = scmp.ne.s32.totalorder %s40, %s56
      %p58 = scmp.eq.s32.totalorder %s18, 0
      %p59 = por %p57, %p58
      %s61 = sadd.s32 %s60, 1
      %p64 = scmp.eq.s32.totalorder %s12, 1
      %p65 = scmp.ne.s32.totalorder %s60, %s62
      %p66 = scmp.eq.s32.totalorder %s12, 0
      %p67 = por %p65, %p66
      %p68 = scmp.ne.s32.totalorder %s60, %s62
      %p69 = scmp.eq.s32.totalorder %s17, 1
      %p70 = por %p68, %p69
      %p71 = scmp.ne.s32.totalorder %s62, %s63
      %p72 = scmp.eq.s32.totalorder %s17, 0
      %p73 = por %p71, %p72
      %p74 = scmp.ne.s32.totalorder %s62, %s63
      %p75 = scmp.eq.s32.totalorder %s18, 1
      %p76 = por %p74, %p75
      %p78 = scmp.ne.s32.totalorder %s63, %s77
      %p79 = scmp.eq.s32.totalorder %s18, 0
      %p80 = por %p78, %p79
      %s82 = sadd.s32 %s81, 1
      %p85 = scmp.eq.s32.totalorder %s12, 1
      %p86 = scmp.ne.s32.totalorder %s81, %s83
      %p87 = scmp.eq.s32.totalorder %s12, 0
      %p88 = por %p86, %p87
      %p89 = scmp.ne.s32.totalorder %s81, %s83
      %p90 = scmp.eq.s32.totalorder %s17, 1
      %p91 = por %p89, %p90
      %p92 = scmp.ne.s32.totalorder %s83, %s84
      %p93 = scmp.eq.s32.totalorder %s17, 0
      %p94 = por %p92, %p93
      %p95 = scmp.ne.s32.totalorder %s83, %s84
      %p96 = scmp.eq.s32.totalorder %s18, 1
      %p97 = por %p95, %p96
      %p99 = scmp.ne.s32.totalorder %s84, %s98
      %p100 = scmp.eq.s32.totalorder %s18, 0
      %p101 = por %p99, %p100
      %s102 = ssub.s32 %s19, %s31
      %s103 = ssub.s32 %s20, %s27
      %s104 = sor.u32 %s102, %s103
      %p105 = scmp.eq.s32.totalorder %s104, 0
      %s107 = sadd.s32 %s106, 1
      %s108 = scalar_select %p105, %s106, %s107
      %p111 = pneg %p105
      %p112 = scmp.eq.s32.totalorder %s12, 1
      %p113 = por %p111, %p112
      %p114 = scmp.ne.s32.totalorder %s106, %s109
      %p115 = scmp.eq.s32.totalorder %s12, 0
      %p116 = por %p114, %p115
      %p117 = scmp.ne.s32.totalorder %s106, %s109
      %p118 = scmp.eq.s32.totalorder %s17, 1
      %p119 = por %p117, %p118
      %p120 = scmp.ne.s32.totalorder %s109, %s110
      %p121 = scmp.eq.s32.totalorder %s17, 0
      %p122 = por %p120, %p121
      %p123 = scmp.ne.s32.totalorder %s109, %s110
      %p124 = scmp.eq.s32.totalorder %s18, 1
      %p125 = por %p123, %p124
      %p127 = scmp.ne.s32.totalorder %s110, %s126
      %p128 = scmp.eq.s32.totalorder %s18, 0
      %p129 = por %p127, %p128
      %p130 = scmp.le.s32.totalorder 1, %s12
      %p131 = scmp.lt.s32.totalorder %s12, 3
      %p132 = pnand %p130, %p131
      %p133 = pneg %p132
      // Predicated region
      $region9: #{tpu_custom_call.1} parent=5 // pred_check
        _
      $region10: #{tpu_custom_call.1} parent=5 // pred_check_branch
        %135 = sbr.rel (%p132) target = $region12
      $region11: #{tpu_custom_call.1} parent=5 // pred_region
        %s136 = ssub.s32 %s12, 1
        // Predicated region
        $region13: #{tpu_custom_call.1} parent=11 // pred_check
          %p137 = pneg %p73
        $region14: #{tpu_custom_call.1} parent=11 // pred_check_branch
          %139 = sbr.rel (%p137) target = $region16
        $region15: #{tpu_custom_call.1} parent=11 // pred_region
          _
        $region16: #{tpu_custom_call.1} parent=11 // pred_fallthru
          _
        // Predicated region
        $region17: #{tpu_custom_call.1} parent=11 // pred_check
          %p140 = pneg %p94
        $region18: #{tpu_custom_call.1} parent=11 // pred_check_branch
          %142 = sbr.rel (%p140) target = $region20
        $region19: #{tpu_custom_call.1} parent=11 // pred_region
          _
        $region20: #{tpu_custom_call.1} parent=11 // pred_fallthru
          _
      $region12: #{tpu_custom_call.1} parent=5 // pred_fallthru
        _
      %p143 = scmp.lt.s32.totalorder %s12, 2
      // Predicated region
      $region21: #{tpu_custom_call.1} parent=5 // pred_check
        %p144 = pneg %p143
      $region22: #{tpu_custom_call.1} parent=5 // pred_check_branch
        %146 = sbr.rel (%p144) target = $region24
      $region23: #{tpu_custom_call.1} parent=5 // pred_region
        // Predicated region
        $region25: #{tpu_custom_call.1} parent=23 // pred_check
          %p147 = pneg %p46
        $region26: #{tpu_custom_call.1} parent=23 // pred_check_branch
          %149 = sbr.rel (%p147) target = $region28
        $region27: #{tpu_custom_call.1} parent=23 // pred_region
          %s150 = sand.u32 %s36, 1
          %s151 = scalar_lea.sflag [#allocation3], %s150
          %s152 = sand.u32 %s36, 1
          %s153 = smul.addr %s152, 32
          %s154 = scalar_lea.vmem [#allocation2], %s153
          %s156 = ssub.s32 512, 512
          %157 = vsyncadd %s151, %s156
          %s158 = smul.addr %s19, 4
          %s159 = sadd.s32 %s20, %s158
          %s160 = smul.addr %s159, 128
          %s161 = scalar_lea.hbm %s0, %s160
          %s162 = sshll.u32 %s154, 4
          %s163 = int_to_ptr.vmem [resolvable:$true] %s162
          %168 = dma.hbm_to_vmem [thread:$0]  %s161, 512, %s163, %s151, 128, 128, 8
        $region28: #{tpu_custom_call.1} parent=23 // pred_fallthru
          _
      $region24: #{tpu_custom_call.1} parent=5 // pred_fallthru
        _
      %p169 = scmp.le.s32.totalorder 1, %s12
      %p170 = scmp.lt.s32.totalorder %s12, 3
      %p171 = pnand %p169, %p170
      %p172 = pneg %p171
      // Predicated region
      $region29: #{tpu_custom_call.1} parent=5 // pred_check
        _
      $region30: #{tpu_custom_call.1} parent=5 // pred_check_branch
        %174 = sbr.rel (%p171) target = $region32
      $region31: #{tpu_custom_call.1} parent=5 // pred_region
        %s175 = ssub.s32 %s12, 1
        %s176 = sand.u32 %s39, 1
        %s177 = scalar_lea.sflag [#allocation3], %s176
        %s178 = sand.u32 %s39, 1
        %s179 = smul.addr %s178, 32
        %s180 = scalar_lea.vmem [#allocation2], %s179
        // Predicated region
        $region33: #{tpu_custom_call.1} parent=31 // pred_check
          %p181 = pneg %p52
        $region34: #{tpu_custom_call.1} parent=31 // pred_check_branch
          %183 = sbr.rel (%p181) target = $region36
        $region35: #{tpu_custom_call.1} parent=31 // pred_region
          %184 = dma.done %s177, 512
        $region36: #{tpu_custom_call.1} parent=31 // pred_fallthru
          _
        %s185 = sand.u32 %s39, 1
        %s186 = scalar_lea.sflag [#allocation3], %s185
        %s187 = sand.u32 %s39, 1
        %s188 = smul.addr %s187, 32
        %s189 = scalar_lea.vmem [#allocation2], %s188
        %p190 = pneg %p52
        %p191 = pneg %p49
        %p192 = pneg %p73
        %p193 = pneg %p70
        %p194 = pneg %p94
        %p195 = pneg %p91
        %p196 = pneg %p122
        %p197 = pneg %p119
        %p198 = scmp.lt.s32.totalorder %s21, 1
        %s199 = scalar_select %p198, %s21, 1
        %p200 = scmp.lt.s32.totalorder %s22, 0
        %s201 = scalar_select %p200, %s22, 0
        %s202 = smul.addr %s199, 4
        %s203 = sadd.s32 %s201, %s202
        %s204 = smul.addr %s203, 4
        %s205 = scalar_lea.vmem %s3, %s204
        %p206 = scmp.lt.s32.totalorder %s21, 1
        %s207 = scalar_select %p206, %s21, 1
        %p208 = scmp.lt.s32.totalorder %s22, 0
        %s209 = scalar_select %p208, %s22, 0
        %s210 = smul.addr %s207, 4
        %s211 = sadd.s32 %s209, %s210
        %s212 = smul.addr %s211, 4
        %s213 = scalar_lea.vmem %s3, %s212
        %v215 = vld [vmem:[%s180] sm:$0xff]
        %v216 = vld [vmem:[%s180 + $0x8] sm:$0xff]
        %v217 = vld [vmem:[%s180 + $0x10] sm:$0xff]
        %v218 = vld [vmem:[%s180 + $0x18] sm:$0xff]
        %v219 = vpack.c.bf16 %v216, %v215
        %v220 = vpack.c.bf16 %v218, %v217
        %v221 = vld [vmem:[%s1] sm:$0xf]
        %v222 = vld [vmem:[%s1 + $0x4] sm:$0xf]
        %v223 = vld [vmem:[%s1 + $0x8] sm:$0xf]
        %v224 = vld [vmem:[%s1 + $0xc] sm:$0x7]
        %v225 = vld [vmem:[%s2] sm:$0xff]
        %v226 = vld [vmem:[%s2 + $0x8] sm:$0xff]
        %v227 = vld [vmem:[%s2 + $0x10] sm:$0xff]
        %v228 = vld [vmem:[%s2 + $0x18] sm:$0x3f]
        %230 = vset.pattern.permute.xlu0 0
        %231 = vperm.xlu0 %230, %v225
        %v232 = vpop.permute.xlu0 %231
        %235 = vset.pattern.permute.xlu0 0
        %236 = vperm.xlu0 %235, %v226
        %v237 = vpop.permute.xlu0 %236
        %240 = vset.pattern.permute.xlu0 0
        %241 = vperm.xlu0 %240, %v227
        %v242 = vpop.permute.xlu0 %241
        %245 = vset.pattern.permute.xlu0 0
        %246 = vperm.xlu0 %245, %v228
        %v247 = vpop.permute.xlu0 %246
        %v253 = vunpack.c.l.b16 %v221
        %v254 = vunpack.c.l.b16 %v222
        %v255 = vunpack.c.l.b16 %v223
        %v256 = vunpack.c.l.b16 %v224
        %v257 = vpack.c.b16 %v254, %v253
        %v258 = vpack.c.b16 %v256, %v255
        %vm259 = vcmask 261120
        %v261 = vsel %vm259, %v257, 0
        %v264 = vsel %vm259, %v258, 0
        %266 = vmatprep.subr.bf16.mxu0 0
        %267 = vmatpush1.bf16.msra.mxu0 %v219
        %268 = vmatprep.subr.bf16.mxu0 0
        %269 = vmatpush1.bf16.msra.mxu0 %v220
        %270 = vmatprep.subr.bf16.mxu0 0
        %271 = vmatpush1.bf16.msra.mxu0 0
        %272 = vmatprep.subr.bf16.mxu0 0
        %273 = vmatpush1.bf16.msra.mxu0 0
        %274 = vmatprep.subr.bf16.mxu0 0
        %275 = vmatpush1.bf16.msra.mxu0 0
        %276 = vmatprep.subr.bf16.mxu0 0
        %277 = vmatpush1.bf16.msra.mxu0 0
        %278 = vmatprep.subr.bf16.mxu0 0
        %279 = vmatpush1.bf16.msra.mxu0 0
        %280 = vmatprep.subr.bf16.mxu0 0
        %281 = vmatpush1.bf16.msra.mxu0 0
        %282 = vmatprep.subr.bf16.mxu0 0
        %283 = vmatpush1.bf16.msra.mxu0 0
        %284 = vmatprep.subr.bf16.mxu0 0
        %285 = vmatpush1.bf16.msra.mxu0 0
        %286 = vmatprep.subr.bf16.mxu0 0
        %287 = vmatpush1.bf16.msra.mxu0 0
        %288 = vmatprep.subr.bf16.mxu0 0
        %289 = vmatpush1.bf16.msra.mxu0 0
        %290 = vmatprep.subr.bf16.mxu0 0
        %291 = vmatpush1.bf16.msra.mxu0 0
        %292 = vmatprep.subr.bf16.mxu0 0
        %293 = vmatpush1.bf16.msra.mxu0 0
        %294 = vmatprep.subr.bf16.mxu0 0
        %295 = vmatpush1.bf16.msra.mxu0 0
        %296 = vmatprep.subr.bf16.mxu0 0
        %297 = vmatpush1.bf16.msra.mxu0 0
        %298 = vmatprep.mubr.bf16.mxu0 0
        %299 = vmatmul.mubr.bf16.gmra.mrb[0].mxu0 %v261
        %v300 = vpop.f32.mrb[0].mxu0
        %v301 = vadd.f32 %v232, %v300
        %v302 = vpop.f32.mrb[0].mxu0
        %v303 = vpop.f32.mrb[0].mxu0
        %v304 = vadd.f32 %v237, %v303
        %v305 = vpop.f32.mrb[0].mxu0
        %306 = vmatprep.mubr.bf16.mxu0 0
        %307 = vmatmul.mubr.bf16.gmra.mrb[0].mxu0 %v264
        %v308 = vpop.f32.mrb[0].mxu0
        %v309 = vadd.f32 %v242, %v308
        %v310 = vpop.f32.mrb[0].mxu0
        %v311 = vpop.f32.mrb[0].mxu0
        %v312 = vadd.f32 %v247, %v311
        %v313 = vpop.f32.mrb[0].mxu0
        %314 = vdwg.mxu0
        %v315 = vpack.c.bf16 %v304, %v301
        %v316 = vpack.c.bf16 %v312, %v309
        %v319 = vunpack.c.l.b16 %v315
        %v320 = vunpack.c.h.b16 %v315
        %v321 = vunpack.c.l.b16 %v316
        %v322 = vunpack.c.h.b16 %v316
        %v323 = vpack.c.b16 %v319, %v319
        %v324 = vpack.c.b16 %v320, %v320
        %v325 = vpack.c.b16 %v321, %v321
        %v326 = vpack.c.b16 %v322, %v322
        %331 = vst [vmem:[%s213] sm:$0xf] %v323
        %332 = vst [vmem:[%s213 + $0x4] sm:$0xf] %v324
        %333 = vst [vmem:[%s213 + $0x8] sm:$0xf] %v325
        %334 = vst [vmem:[%s213 + $0xc] sm:$0x7] %v326
        %p335 = scmp.lt.s32.totalorder %s21, 1
        %s336 = scalar_select %p335, %s21, 1
        %p337 = scmp.lt.s32.totalorder %s22, 0
        %s338 = scalar_select %p337, %s22, 0
        %s339 = smul.addr %s336, 4
        %s340 = sadd.s32 %s338, %s339
        %s341 = smul.addr %s340, 4
        %s342 = scalar_lea.vmem %s3, %s341
        // Predicated region
        $region37: #{tpu_custom_call.1} parent=31 // pred_check
          %p343 = pneg %p119
        $region38: #{tpu_custom_call.1} parent=31 // pred_check_branch
          %345 = sbr.rel (%p343) target = $region40
        $region39: #{tpu_custom_call.1} parent=31 // pred_region
          _
        $region40: #{tpu_custom_call.1} parent=31 // pred_fallthru
          _
      $region32: #{tpu_custom_call.1} parent=5 // pred_fallthru
        _
      %p346 = scmp.le.s32.totalorder 2, %s12
      // Predicated region
      $region41: #{tpu_custom_call.1} parent=5 // pred_check
        %p347 = pneg %p346
      $region42: #{tpu_custom_call.1} parent=5 // pred_check_branch
        %349 = sbr.rel (%p347) target = $region44
      $region43: #{tpu_custom_call.1} parent=5 // pred_region
        %s350 = ssub.s32 %s12, 2
        // Predicated region
        $region45: #{tpu_custom_call.1} parent=43 // pred_check
          %p351 = pneg %p125
        $region46: #{tpu_custom_call.1} parent=43 // pred_check_branch
          %353 = sbr.rel (%p351) target = $region48
        $region47: #{tpu_custom_call.1} parent=43 // pred_region
          %p354 = scmp.lt.s32.totalorder %s23, 1
          %s355 = scalar_select %p354, %s23, 1
          %p356 = scmp.lt.s32.totalorder %s24, 0
          %s357 = scalar_select %p356, %s24, 0
          %s358 = smul.addr %s355, 4
          %s359 = sadd.s32 %s357, %s358
          %s360 = smul.addr %s359, 4
          %s361 = scalar_lea.vmem %s3, %s360
        $region48: #{tpu_custom_call.1} parent=43 // pred_fallthru
          _
      $region44: #{tpu_custom_call.1} parent=5 // pred_fallthru
        _
    $region6: #{tpu_custom_call.1} parent=1 // loop_footer
      %s16 = sadd.s32 1, %s12
    $region7: #{tpu_custom_call.1} parent=1 // loop_footer_branch
      %11 = sbr.rel target = $region3
    $region8: #{tpu_custom_call.1} parent=1 // loop_exit
      _
    %362 = vsyncpa [#allocation3], 1
    %s363 = scalar_lea.sflag [#allocation3], 1
    %364 = vsyncpa %s363, 1

</llo_original>
